<compile_context>
chip_gen: v7x
topology: tpu7x:2x2x1
jax: 0.10.0
libtpu: 0.0.40
codegen_flags: <defaults>
</compile_context>

<pallas_src>
import jax
import jax.numpy as jnp
from jax import lax
from jax.experimental import pallas as pl
from jax.experimental.pallas import tpu as pltpu

IN_FEATURES = 64
OUT_FEATURES = 8

# Below this batch size the pallas_call fixed cost dominates; let XLA fuse.
# TODO(synk): re-derive this threshold empirically now that TB is much larger.
_PALLAS_MIN_BATCH = 4096
# Batch tile: 8192 rows -> 2 MiB x tile (f32), ~4.6 MiB total double-buffered
# VMEM; large enough to amortize grid-step overhead, small enough for v5e's
# 16 MiB scoped-VMEM default.
_DEFAULT_BLOCK_B = 8192


def _linear_tanh_kernel(x_ref, w_ref, b_ref, o_ref):
    # x_ref: (TB, 64)   w_ref: (8, 64)   b_ref: (8, 1)   o_ref: (8, TB)
    # Contract last axes of W and x -> y^T with the batch on the lane axis.
    yt = lax.dot_general(
        w_ref[...], x_ref[...],
        dimension_numbers=(((1,), (1,)), ((), ())),
        preferred_element_type=jnp.float32,
    )                                     # (8, TB), f32 accumulate
    yt = yt + b_ref[...]                  # (8, 1) broadcast over lanes
    o_ref[...] = jnp.tanh(yt).astype(o_ref.dtype)


def _choose_tile(batch, block_b):
    """Pick a batch tile: full array for small B, else a 128-multiple capped so
    the grid has at least 2 steps (v7x megacore)."""
    if batch <= 256:
        return batch                      # single full-extent tile
    half = ((pl.cdiv(batch, 2) + 127) // 128) * 128   # >= B/2, mult of 128
    tb = min(block_b, half, batch)
    tb = max(128, (tb // 128) * 128)      # lane-dense (8, tb) needs tb % 128 == 0
    return tb


def _linear_tanh_pallas(x, w, b_col, block_b):
    B = x.shape[0]
    tb = _choose_tile(B, block_b)
    grid = (pl.cdiv(B, tb),)
    yt = pl.pallas_call(
        _linear_tanh_kernel,
        out_shape=jax.ShapeDtypeStruct((OUT_FEATURES, B), x.dtype),
        grid_spec=pltpu.PrefetchScalarGridSpec(
            num_scalar_prefetch=0,
            grid=grid,
            in_specs=[
                pl.BlockSpec((tb, IN_FEATURES), lambda i: (i, 0)),            # x tile
                pl.BlockSpec((OUT_FEATURES, IN_FEATURES), lambda i: (0, 0)),  # W (resident)
                pl.BlockSpec((OUT_FEATURES, 1), lambda i: (0, 0)),            # bias (resident)
            ],
            out_specs=pl.BlockSpec((OUT_FEATURES, tb), lambda i: (0, i)),     # y^T tile
        ),
        compiler_params=pltpu.CompilerParams(
            # Independent batch tiles: allow megacore sharding on v7x.
            dimension_semantics=("parallel",),
        ),
    )(x, w, b_col)
    return yt


def linear_tanh(x, weight, bias, *, block_b=_DEFAULT_BLOCK_B, force_pallas=False):
    """tanh(x @ weight.T + bias), matching torch.nn.Linear(64, 8) + tanh.

    x: [B, 64] (f32 or bf16), weight: [8, 64] (PyTorch layout), bias: [8].
    Returns [B, 8] in x's dtype.
    """
    B = x.shape[0]
    if (not force_pallas) and B < _PALLAS_MIN_BATCH:
        # Tiny batches: a fused XLA dot+tanh beats the kernel's fixed overhead.
        return jnp.tanh(x @ weight.T + bias.reshape(1, OUT_FEATURES)).astype(x.dtype)
    b_col = bias.reshape(OUT_FEATURES, 1).astype(jnp.float32)
    yt = _linear_tanh_pallas(x, weight, b_col, block_b)   # (8, B), lane-dense
    return yt.T                                           # cheap wrapper-side transpose


if __name__ == "__main__":
    key = jax.random.PRNGKey(0)
    kx, kw, kb, kx2 = jax.random.split(key, 4)

    # Deterministic params (mimic nn.Linear uniform(-1/sqrt(64), 1/sqrt(64)))
    bound = 1.0 / jnp.sqrt(jnp.float32(IN_FEATURES))
    W = jax.random.uniform(kw, (OUT_FEATURES, IN_FEATURES),
                           minval=-bound, maxval=bound, dtype=jnp.float32)
    b = jax.random.uniform(kb, (OUT_FEATURES,),
                           minval=-bound, maxval=bound, dtype=jnp.float32)

    # Small example input consistent with the module: batch=8, features=64.
    x_small = jax.random.normal(kx, (8, IN_FEATURES), dtype=jnp.float32)
    out_small = jax.block_until_ready(linear_tanh(x_small, W, b, force_pallas=True))
    ref_small = jnp.tanh(x_small @ W.T + b)
    assert out_small.shape == (8, OUT_FEATURES)
    assert jnp.allclose(out_small, ref_small, atol=1e-5, rtol=1e-5), "small-batch mismatch"

    # Larger batch exercises the tiled, pipelined, multi-grid-step path
    # (tile chooser caps the tile so the grid has >= 2 steps).
    x_big = jax.random.normal(kx2, (2048, IN_FEATURES), dtype=jnp.float32)
    out_big = jax.block_until_ready(linear_tanh(x_big, W, b, force_pallas=True))
    ref_big = jnp.tanh(x_big @ W.T + b)
    assert out_big.shape == (2048, OUT_FEATURES)
    assert jnp.allclose(out_big, ref_big, atol=1e-5, rtol=1e-5), "tiled-batch mismatch"

    # bf16 input path (halves HBM read traffic; accumulation/tanh still f32).
    x_bf16 = x_big.astype(jnp.bfloat16)
    out_bf16 = jax.block_until_ready(linear_tanh(x_bf16, W, b, force_pallas=True))
    ref_bf16 = jnp.tanh(x_bf16.astype(jnp.float32) @ W.T + b)
    assert out_bf16.shape == (2048, OUT_FEATURES)
    assert jnp.allclose(out_bf16.astype(jnp.float32), ref_bf16,
                        atol=2e-2, rtol=2e-2), "bf16 mismatch"

    print("KERNEL_OK")
</pallas_src>

<mosaic_0001>
module attributes {stable_mosaic.version = 11 : i64} {
  func.func @_linear_tanh_kernel(%arg0: i32, %arg1: memref<8x64xf32, #tpu.memory_space<vmem>>, %arg2: memref<8x64xf32, #tpu.memory_space<vmem>>, %arg3: memref<8x1xf32, #tpu.memory_space<vmem>>, %arg4: memref<8x8xf32, #tpu.memory_space<vmem>>) attributes {dimension_semantics = [#tpu.dimension_semantics<parallel>], iteration_bounds = array<i64: 1>, scalar_prefetch = 0 : i64, scratch_operands = 0 : i64, tpu.core_type = #tpu.core_type<tc>, window_params = [{transform_indices = @transform_0, window_bounds = array<i64: 8, 64>}, {pipeline_mode = #tpu.pipeline_mode<synchronous>, transform_indices = @transform_1, window_bounds = array<i64: 8, 64>}, {pipeline_mode = #tpu.pipeline_mode<synchronous>, transform_indices = @transform_2, window_bounds = array<i64: 8, 1>}, {transform_indices = @transform_3, window_bounds = array<i64: 8, 8>}]} {
    %c0 = arith.constant 0 : index
    %c0_0 = arith.constant 0 : index
    %0 = vector.load %arg2[%c0, %c0_0] : memref<8x64xf32, #tpu.memory_space<vmem>>, vector<8x64xf32>
    %c0_1 = arith.constant 0 : index
    %c0_2 = arith.constant 0 : index
    %1 = vector.load %arg1[%c0_1, %c0_2] : memref<8x64xf32, #tpu.memory_space<vmem>>, vector<8x64xf32>
    %cst = arith.constant dense<0.000000e+00> : vector<8x8xf32>
    %2 = tpu.matmul %0, %1, %cst {dimension_numbers = #tpu.dot_dimension_numbers<[1], [1], [0], [0], [0, 0, 1, 0], [], []>} : vector<8x64xf32>, vector<8x64xf32>, vector<8x8xf32> -> vector<8x8xf32>
    %c0_3 = arith.constant 0 : index
    %c0_4 = arith.constant 0 : index
    %3 = vector.load %arg3[%c0_3, %c0_4] : memref<8x1xf32, #tpu.memory_space<vmem>>, vector<8x1xf32>
    %4 = vector.broadcast %3 : vector<8x1xf32> to vector<8x8xf32>
    %5 = arith.addf %2, %4 : vector<8x8xf32>
    %6 = math.tanh %5 : vector<8x8xf32>
    %c0_5 = arith.constant 0 : index
    %c0_6 = arith.constant 0 : index
    %7 = vector.load %arg4[%c0_5, %c0_6] : memref<8x8xf32, #tpu.memory_space<vmem>>, vector<8x8xf32>
    tpu.vector_store %arg4[%c0_5, %c0_6], %6 {strides = array<i32>} : memref<8x8xf32, #tpu.memory_space<vmem>>, vector<8x8xf32>,
    return
  }
  func.func @transform_0(%arg0: i32) -> (i32, i32) {
    %c0_i32 = arith.constant 0 : i32
    %c0_i32_0 = arith.constant 0 : i32
    return %arg0, %c0_i32 : i32, i32
  }
  func.func @transform_1(%arg0: i32) -> (i32, i32) {
    %c0_i32 = arith.constant 0 : i32
    %c0_i32_0 = arith.constant 0 : i32
    %c0_i32_1 = arith.constant 0 : i32
    return %c0_i32, %c0_i32_0 : i32, i32
  }
  func.func @transform_2(%arg0: i32) -> (i32, i32) {
    %c0_i32 = arith.constant 0 : i32
    %c0_i32_0 = arith.constant 0 : i32
    %c0_i32_1 = arith.constant 0 : i32
    return %c0_i32, %c0_i32_0 : i32, i32
  }
  func.func @transform_3(%arg0: i32) -> (i32, i32) {
    %c0_i32 = arith.constant 0 : i32
    %c0_i32_0 = arith.constant 0 : i32
    return %c0_i32, %arg0 : i32, i32
  }
}

</mosaic_0001>

<llo_original>
// kernel: tpu_custom_call.1
$region0: #{tpu_custom_call.1}
  #allocation0 [shape = 'u32[]', space=smem, size = 0x4, offset = 0x4, fixed_abs, tag = 'smem constant byte address 0x4 - core index']
  #allocation1 [shape = 'u32[144,128]{1,0:T(1,128)}', space=vmem, size = 0x12000, scoped, tag = 'internal scratch']
  %s0 = inlined_call_operand.vmem [shape: f32[8,64], index: 0, kind: input, shape index: {}]
  %s1 = inlined_call_operand.hbm [shape: f32[8,64], index: 1, kind: input, shape index: {}]
  %s2 = inlined_call_operand.vmem [shape: f32[8,1], index: 2, kind: input, shape index: {}]
  %s3 = inlined_call_operand.hbm [shape: f32[8,8], index: 3, kind: output, shape index: {}]
  %s4 = sld [smem:[#allocation0]]
  $region26: #{tpu_custom_call.1} parent=0
    _
  %s6 = ssub.s32 1, %s4
  %s7 = scalar_select 0, %s6, %s4
  $region1: #{tpu_custom_call.1} parent=0
    #allocation2 [shape = 'u8[4096]{0}', space=vmem, size = 0x1000, scoped, tag = 'input window, operand 1, single buffered']
    #allocation3 [shape = 's32[1]{0}', space=sflag, size = 0x4, scoped, tag = 'scoped memory for tpu_custom_call.1']
    #allocation4 [shape = 's32[1]{0}', space=sflag, size = 0x4, scoped, tag = 'scoped memory for tpu_custom_call.1']
    #allocation5 [shape = 'u8[4096]{0}', space=vmem, size = 0x1000, scoped, tag = 'output window, operand 0, single buffered']
    %8 = vsyncpa [#allocation3], 0
    %9 = vsyncpa [#allocation4], 0
    // Predicated region
    $region2: #{tpu_custom_call.1} parent=1 // pred_check
      _
    $region3: #{tpu_custom_call.1} parent=1 // pred_check_branch
      %11 = sbr.rel (0) target = $region5
    $region4: #{tpu_custom_call.1} parent=1 // pred_region
      _
    $region5: #{tpu_custom_call.1} parent=1 // pred_fallthru
      _
    // Predicated region
    $region6: #{tpu_custom_call.1} parent=1 // pred_check
      _
    $region7: #{tpu_custom_call.1} parent=1 // pred_check_branch
      %13 = sbr.rel (0) target = $region9
    $region8: #{tpu_custom_call.1} parent=1 // pred_region
      %s15 = ssub.s32 128, 128
      %16 = vsyncadd [#allocation3], %s15
      %s18 = sshll.u32 [#allocation2], 4
      %s19 = int_to_ptr.vmem [resolvable:$true] %s18
      %21 = dma.hbm_to_vmem [thread:$0]  %s1, 128, %s19, [#allocation3]
    $region9: #{tpu_custom_call.1} parent=1 // pred_fallthru
      _
    // Predicated region
    $region10: #{tpu_custom_call.1} parent=1 // pred_check
      _
    $region11: #{tpu_custom_call.1} parent=1 // pred_check_branch
      %23 = sbr.rel (0) target = $region13
    $region12: #{tpu_custom_call.1} parent=1 // pred_region
      _
    $region13: #{tpu_custom_call.1} parent=1 // pred_fallthru
      _
    // Predicated region
    $region14: #{tpu_custom_call.1} parent=1 // pred_check
      _
    $region15: #{tpu_custom_call.1} parent=1 // pred_check_branch
      %25 = sbr.rel (0) target = $region17
    $region16: #{tpu_custom_call.1} parent=1 // pred_region
      %26 = dma.done [#allocation3], 128
    $region17: #{tpu_custom_call.1} parent=1 // pred_fallthru
      _
    %v27 = vld [vmem:[#allocation2] sm:$0xff]
    %v28 = vld [vmem:[%s0] sm:$0xff]
    %v29 = vld [vmem:[%s2] sm:$0xff]
    %31 = vset.pattern.permute.xlu0 0
    %32 = vperm.xlu0 %31, %v29
    %v33 = vpop.permute.xlu0 %32
    %vm35 = vcmask 523264
    %v37 = vsel %vm35, %v27, 0
    %v40 = vsel %vm35, %v28, 0
    %42 = vmatprep.subr.mxu0 0.0
    %43 = vmatpush1.xpose.msra.mxu0 %v40
    %44 = vmatprep.subr.mxu0 0.0
    %45 = vmatpush1.xpose.msra.mxu0 0.0
    %46 = vmatprep.subr.mxu0 0.0
    %47 = vmatpush1.xpose.msra.mxu0 0.0
    %48 = vmatprep.subr.mxu0 0.0
    %49 = vmatpush1.xpose.msra.mxu0 0.0
    %50 = vmatprep.subr.mxu0 0.0
    %51 = vmatpush1.xpose.msra.mxu0 0.0
    %52 = vmatprep.subr.mxu0 0.0
    %53 = vmatpush1.xpose.msra.mxu0 0.0
    %54 = vmatprep.subr.mxu0 0.0
    %55 = vmatpush1.xpose.msra.mxu0 0.0
    %56 = vmatprep.subr.mxu0 0.0
    %57 = vmatpush1.xpose.msra.mxu0 0.0
    %58 = vmatprep.subr.mxu0 0.0
    %59 = vmatpush1.xpose.msra.mxu0 0.0
    %60 = vmatprep.subr.mxu0 0.0
    %61 = vmatpush1.xpose.msra.mxu0 0.0
    %62 = vmatprep.subr.mxu0 0.0
    %63 = vmatpush1.xpose.msra.mxu0 0.0
    %64 = vmatprep.subr.mxu0 0.0
    %65 = vmatpush1.xpose.msra.mxu0 0.0
    %66 = vmatprep.subr.mxu0 0.0
    %67 = vmatpush1.xpose.msra.mxu0 0.0
    %68 = vmatprep.subr.mxu0 0.0
    %69 = vmatpush1.xpose.msra.mxu0 0.0
    %70 = vmatprep.subr.mxu0 0.0
    %71 = vmatpush1.xpose.msra.mxu0 0.0
    %72 = vmatprep.subr.mxu0 0.0
    %73 = vmatpush1.xpose.msra.mxu0 0.0
    %74 = vmatprep.subr.mxu0 0.0
    %75 = vmatpush1.xpose.msra.mxu0 0.0
    %76 = vmatprep.subr.mxu0 0.0
    %77 = vmatpush1.xpose.msra.mxu0 0.0
    %78 = vmatprep.subr.mxu0 0.0
    %79 = vmatpush1.xpose.msra.mxu0 0.0
    %80 = vmatprep.subr.mxu0 0.0
    %81 = vmatpush1.xpose.msra.mxu0 0.0
    %82 = vmatprep.subr.mxu0 0.0
    %83 = vmatpush1.xpose.msra.mxu0 0.0
    %84 = vmatprep.subr.mxu0 0.0
    %85 = vmatpush1.xpose.msra.mxu0 0.0
    %86 = vmatprep.subr.mxu0 0.0
    %87 = vmatpush1.xpose.msra.mxu0 0.0
    %88 = vmatprep.subr.mxu0 0.0
    %89 = vmatpush1.xpose.msra.mxu0 0.0
    %90 = vmatprep.subr.mxu0 0.0
    %91 = vmatpush1.xpose.msra.mxu0 0.0
    %92 = vmatprep.subr.mxu0 0.0
    %93 = vmatpush1.xpose.msra.mxu0 0.0
    %94 = vmatprep.subr.mxu0 0.0
    %95 = vmatpush1.xpose.msra.mxu0 0.0
    %96 = vmatprep.subr.mxu0 0.0
    %97 = vmatpush1.xpose.msra.mxu0 0.0
    %98 = vmatprep.subr.mxu0 0.0
    %99 = vmatpush1.xpose.msra.mxu0 0.0
    %100 = vmatprep.subr.mxu0 0.0
    %101 = vmatpush1.xpose.msra.mxu0 0.0
    %102 = vmatprep.subr.mxu0 0.0
    %103 = vmatpush1.xpose.msra.mxu0 0.0
    %104 = vmatprep.subr.mxu0 0.0
    %105 = vmatpush1.xpose.msra.mxu0 0.0
    %106 = vmatprep.mubr.f32.mxu0 0.0
    %107 = vmatmul.mubr.f32.gmra.mrb[0].mxu0 %v37
    %v108 = vpop.f32.mrb[0].mxu0
    %v109 = vadd.f32 %v33, %v108
    %v110 = vpop.f32.mrb[0].mxu0
    %111 = vdwg.mxu0
    %v112 = vtanh.pop %v109
    %vm113 = vcmask 64512
    %114 = vst.msk [vmem:[#allocation5] sm:$0xff] %vm113, %v112
    // Predicated region
    $region18: #{tpu_custom_call.1} parent=1 // pred_check
      _
    $region19: #{tpu_custom_call.1} parent=1 // pred_check_branch
      %116 = sbr.rel (0) target = $region21
    $region20: #{tpu_custom_call.1} parent=1 // pred_region
      %s118 = ssub.s32 128, 128
      %119 = vsyncadd [#allocation4], %s118
      %s121 = sshll.u32 [#allocation5], 4
      %s122 = int_to_ptr.vmem [resolvable:$true] %s121
      %124 = dma.vmem_to_hbm [thread:$0]  %s122, 128, %s3, [#allocation4]
    $region21: #{tpu_custom_call.1} parent=1 // pred_fallthru
      _
    // Predicated region
    $region22: #{tpu_custom_call.1} parent=1 // pred_check
      _
    $region23: #{tpu_custom_call.1} parent=1 // pred_check_branch
      %126 = sbr.rel (0) target = $region25
    $region24: #{tpu_custom_call.1} parent=1 // pred_region
      %127 = dma.done [#allocation4], 128
    $region25: #{tpu_custom_call.1} parent=1 // pred_fallthru
      _
    %128 = vsyncpa [#allocation3], 1
    %129 = vsyncpa [#allocation4], 1

</llo_original>
